<compile_context>
chip_gen: v6e
topology: v6e:2x2x1
jax: 0.10.0
libtpu: 0.0.40
codegen_flags: <defaults>
</compile_context>

<pallas_src>
import functools

import jax
import jax.numpy as jnp
from jax.experimental import pallas as pl
from jax.experimental.pallas import tpu as pltpu


def _round_up(v: int, m: int) -> int:
    return ((v + m - 1) // m) * m


def _divisor_tile(dim: int, align: int, tmax: int) -> int:
    """Largest multiple of `align` that divides `dim` and is <= max(tmax, align).

    Assumes dim % align == 0."""
    tmax = max(tmax, align)
    units = dim // align
    best = 1
    d = 1
    while d * d <= units:
        if units % d == 0:
            for c in (d, units // d):
                if c * align <= tmax and c > best:
                    best = c
        d += 1
    return best * align


def _pick_tile(dim: int, align: int, tmax: int) -> int:
    """Tile for a non-reduction dim: exact divisor when aligned, else full dim
    (single block) for small dims, else an aligned tile with a partial edge."""
    tmax = max(align, tmax)
    if dim % align == 0:
        return _divisor_tile(dim, align, tmax)
    if dim <= tmax:
        return dim                      # full-dim block (always layout-legal)
    return (tmax // align) * align      # partial last block (discarded rows/cols)


def _dense_relu_kernel(x_ref, w_ref, b_ref, o_ref, acc_ref=None):
    k = pl.program_id(2)
    # f32 accumulator: either a VMEM scratch (non-f32 outputs) or o_ref itself.
    acc = o_ref if acc_ref is None else acc_ref

    @pl.when(k == 0)
    def _():
        acc[...] = jnp.zeros_like(acc)

    # Hot path: bf16 (or f32) tiles on the MXU, accumulated in f32.
    acc[...] += jnp.dot(x_ref[...], w_ref[...], preferred_element_type=jnp.float32)

    @pl.when(k == pl.num_programs(2) - 1)
    def _():
        # Epilogue (VPU): bias add + ReLU in f32, cast to output dtype.
        y = jnp.maximum(acc[...] + b_ref[...].astype(jnp.float32), 0.0)
        o_ref[...] = y.astype(o_ref.dtype)


@functools.partial(jax.jit, static_argnames=("tm", "tn", "tk", "compute_dtype"))
def dense_relu(x, w, b, *, tm=512, tn=512, tk=1024, compute_dtype=jnp.bfloat16):
    """y = relu(x @ w + b).  x: [..., K], w: [K, N], b: [1, N] -> y: [..., N]."""
    K = x.shape[-1]
    Kw, N = w.shape
    assert Kw == K and b.shape == (1, N)

    lead = x.shape[:-1]
    x2 = x.reshape(-1, K)
    M = x2.shape[0]
    out_dtype = x.dtype

    cdtype = jnp.dtype(compute_dtype) if compute_dtype is not None else jnp.dtype(x.dtype)
    # NOTE: with bf16 operands the matmul is bf16xbf16 -> f32 (matches MXU native
    # path); keep compute_dtype=jnp.float32 if exact f32 products are required.
    xc = x2.astype(cdtype)
    wc = w.astype(cdtype)

    # ---------------- tile selection (trace-time Python) ----------------
    align_m = 16 if cdtype.itemsize < 4 else 8   # bf16 sublane packing
    tm = _pick_tile(M, align_m, tm)
    tn = _pick_tile(N, 128, tn)

    # K must never carry a garbage tail (it feeds the reduction): either use an
    # exact divisor tile, a single full-K block, or zero-pad K to 128 alignment.
    tk = max(128, (tk // 128) * 128)
    if K % 128 == 0:
        tk = _divisor_tile(K, 128, tk)
        Kp = K
    elif K <= tk:
        tk = K
        Kp = K
    else:
        Kp = _round_up(K, 128)
        tk = _divisor_tile(Kp, 128, tk)
        xc = jnp.pad(xc, ((0, 0), (0, Kp - K)))
        wc = jnp.pad(wc, ((0, Kp - K), (0, 0)))

    # v7x megacore: try to give at least one parallel axis >= 2 blocks.
    if pl.cdiv(M, tm) == 1 and pl.cdiv(N, tn) == 1:
        if N % 128 == 0 and N >= 256:
            tn = _divisor_tile(N, 128, N // 2)
        elif M % align_m == 0 and M >= 2 * align_m:
            tm = _divisor_tile(M, align_m, M // 2)

    grid_m, grid_n, grid_k = pl.cdiv(M, tm), pl.cdiv(N, tn), Kp // tk
    grid = (grid_m, grid_n, grid_k)

    use_scratch = jnp.dtype(out_dtype) != jnp.dtype(jnp.float32)
    scratch = [pltpu.VMEM((tm, tn), jnp.float32)] if use_scratch else []

    cbytes = cdtype.itemsize
    obytes = jnp.dtype(out_dtype).itemsize
    bbytes = jnp.dtype(b.dtype).itemsize

    # Double-buffered tile footprint + slack; clamp to a budget safe on v7x.
    vmem_bytes = (2 * (tm * tk + tk * tn) * cbytes
                  + 2 * tm * tn * obytes
                  + 2 * tn * bbytes
                  + (tm * tn * 4 if use_scratch else 0))
    vmem_limit = int(min(max(2 * vmem_bytes + (2 << 20), 32 << 20), 48 << 20))

    bytes_accessed = (grid_n * M * Kp * cbytes      # x re-read per N tile
                      + grid_m * Kp * N * cbytes    # w re-read per M tile
                      + M * N * obytes + N * bbytes)

    y = pl.pallas_call(
        _dense_relu_kernel,
        out_shape=jax.ShapeDtypeStruct((M, N), out_dtype),
        grid_spec=pltpu.PrefetchScalarGridSpec(
            num_scalar_prefetch=0,
            grid=grid,
            in_specs=[
                pl.BlockSpec((tm, tk), lambda i, j, k: (i, k)),
                pl.BlockSpec((tk, tn), lambda i, j, k: (k, j)),
                pl.BlockSpec((1, tn), lambda i, j, k: (0, j)),
            ],
            out_specs=pl.BlockSpec((tm, tn), lambda i, j, k: (i, j)),
            scratch_shapes=scratch,
        ),
        compiler_params=pltpu.CompilerParams(
            dimension_semantics=("parallel", "parallel", "arbitrary"),
            vmem_limit_bytes=vmem_limit,
        ),
        cost_estimate=pl.CostEstimate(
            flops=2 * M * N * Kp,
            transcendentals=0,
            bytes_accessed=int(bytes_accessed),
        ),
    )(xc, wc, b)

    return y.reshape(*lead, N)


def _reference_f32(x, w, b):
    y = jnp.dot(x, w, preferred_element_type=jnp.float32) + b
    return jnp.maximum(y, 0.0)


def _reference_bf16(x, w, b):
    y = jnp.dot(x.astype(jnp.bfloat16), w.astype(jnp.bfloat16),
                preferred_element_type=jnp.float32) + b
    return jnp.maximum(y, 0.0)


if __name__ == "__main__":
    key = jax.random.PRNGKey(0)

    # --- Case 1: shapes implied by the module (batch=8, in=32, out=32), bf16 path
    B, C_IN, C_OUT = 8, 32, 32
    kx, kw, kb, key2 = jax.random.split(key, 4)
    bound = 1.0 / jnp.sqrt(jnp.float32(C_IN))
    # Weight stored as [C_in, C_out] (transpose of torch's [out, in]).
    w = jax.random.uniform(kw, (C_IN, C_OUT), jnp.float32, -bound, bound)
    b = jax.random.uniform(kb, (1, C_OUT), jnp.float32, -bound, bound)
    x = jax.random.normal(kx, (B, C_IN), jnp.float32)

    y = dense_relu(x, w, b)
    jax.block_until_ready(y)
    assert y.shape == (B, C_OUT) and y.dtype == x.dtype
    assert jnp.allclose(y, _reference_bf16(x, w, b), atol=1e-4, rtol=1e-4)
    assert jnp.allclose(y, _reference_f32(x, w, b), atol=5e-2, rtol=5e-2)

    # --- Case 2: multi-tile grid (2,2,2), pure f32 operands, o_ref accumulation
    M2, K2, N2 = 32, 256, 256
    kx2, kw2, kb2, key3 = jax.random.split(key2, 4)
    bound2 = 1.0 / jnp.sqrt(jnp.float32(K2))
    w2 = jax.random.uniform(kw2, (K2, N2), jnp.float32, -bound2, bound2)
    b2 = jax.random.uniform(kb2, (1, N2), jnp.float32, -bound2, bound2)
    x2 = jax.random.normal(kx2, (M2, K2), jnp.float32)

    y2 = dense_relu(x2, w2, b2, tm=16, tn=128, tk=128, compute_dtype=jnp.float32)
    jax.block_until_ready(y2)
    assert y2.shape == (M2, N2)
    assert jnp.allclose(y2, _reference_f32(x2, w2, b2), atol=2e-3, rtol=2e-3)

    # --- Case 3: default tiles, bf16 path, N split so a parallel axis has 3 blocks
    M3, K3, N3 = 256, 512, 384
    kx3, kw3, kb3 = jax.random.split(key3, 3)
    bound3 = 1.0 / jnp.sqrt(jnp.float32(K3))
    w3 = jax.random.uniform(kw3, (K3, N3), jnp.float32, -bound3, bound3)
    b3 = jax.random.uniform(kb3, (1, N3), jnp.float32, -bound3, bound3)
    x3 = jax.random.normal(kx3, (M3, K3), jnp.float32)

    y3 = dense_relu(x3, w3, b3)
    jax.block_until_ready(y3)
    assert y3.shape == (M3, N3)
    assert jnp.allclose(y3, _reference_bf16(x3, w3, b3), atol=2e-3, rtol=2e-3)

    print("KERNEL_OK")
</pallas_src>

<mosaic_0001>
module attributes {stable_mosaic.version = 11 : i64} {
  func.func @_dense_relu_kernel(%arg0: i32, %arg1: i32, %arg2: i32, %arg3: memref<8x32xbf16, #tpu.memory_space<vmem>>, %arg4: memref<32x32xbf16, #tpu.memory_space<vmem>>, %arg5: memref<1x32xf32, #tpu.memory_space<vmem>>, %arg6: memref<8x32xf32, #tpu.memory_space<vmem>>) attributes {dimension_semantics = [#tpu.dimension_semantics<parallel>, #tpu.dimension_semantics<parallel>, #tpu.dimension_semantics<arbitrary>], iteration_bounds = array<i64: 1, 1, 1>, scalar_prefetch = 0 : i64, scratch_operands = 0 : i64, tpu.core_type = #tpu.core_type<tc>, window_params = [{transform_indices = @transform_0, window_bounds = array<i64: 8, 32>}, {transform_indices = @transform_1, window_bounds = array<i64: 32, 32>}, {transform_indices = @transform_2, window_bounds = array<i64: 1, 32>}, {transform_indices = @transform_3, window_bounds = array<i64: 8, 32>}]} {
    %c0_i32 = arith.constant 0 : i32
    %0 = arith.cmpi eq, %arg2, %c0_i32 : i32
    %1 = arith.extui %0 : i1 to i32
    %c0_i32_0 = arith.constant 0 : i32
    %2 = arith.cmpi ne, %1, %c0_i32_0 : i32
    scf.if %2 {
      %cst_10 = arith.constant 0.000000e+00 : f32
      %12 = vector.broadcast %cst_10 : f32 to vector<8x32xf32>
      %c0_11 = arith.constant 0 : index
      %c0_12 = arith.constant 0 : index
      %13 = vector.load %arg6[%c0_11, %c0_12] : memref<8x32xf32, #tpu.memory_space<vmem>>, vector<8x32xf32>
      tpu.vector_store %arg6[%c0_11, %c0_12], %12 {strides = array<i32>} : memref<8x32xf32, #tpu.memory_space<vmem>>, vector<8x32xf32>,
    } else {
    }
    %c0 = arith.constant 0 : index
    %c0_1 = arith.constant 0 : index
    %3 = vector.load %arg6[%c0, %c0_1] : memref<8x32xf32, #tpu.memory_space<vmem>>, vector<8x32xf32>
    %c0_2 = arith.constant 0 : index
    %c0_3 = arith.constant 0 : index
    %4 = vector.load %arg3[%c0_2, %c0_3] : memref<8x32xbf16, #tpu.memory_space<vmem>>, vector<8x32xbf16>
    %c0_4 = arith.constant 0 : index
    %c0_5 = arith.constant 0 : index
    %5 = vector.load %arg4[%c0_4, %c0_5] : memref<32x32xbf16, #tpu.memory_space<vmem>>, vector<32x32xbf16>
    %cst = arith.constant dense<0.000000e+00> : vector<8x32xf32>
    %6 = tpu.matmul %4, %5, %cst {dimension_numbers = #tpu.dot_dimension_numbers<[1], [0], [0], [1], [0, 0, 1, 1], [], []>} : vector<8x32xbf16>, vector<32x32xbf16>, vector<8x32xf32> -> vector<8x32xf32>
    %7 = arith.addf %3, %6 : vector<8x32xf32>
    %c0_6 = arith.constant 0 : index
    %c0_7 = arith.constant 0 : index
    %8 = vector.load %arg6[%c0_6, %c0_7] : memref<8x32xf32, #tpu.memory_space<vmem>>, vector<8x32xf32>
    tpu.vector_store %arg6[%c0_6, %c0_7], %7 {strides = array<i32>} : memref<8x32xf32, #tpu.memory_space<vmem>>, vector<8x32xf32>,
    %c0_i32_8 = arith.constant 0 : i32
    %9 = arith.cmpi eq, %arg2, %c0_i32_8 : i32
    %10 = arith.extui %9 : i1 to i32
    %c0_i32_9 = arith.constant 0 : i32
    %11 = arith.cmpi ne, %10, %c0_i32_9 : i32
    scf.if %11 {
      %c0_10 = arith.constant 0 : index
      %c0_11 = arith.constant 0 : index
      %12 = vector.load %arg6[%c0_10, %c0_11] : memref<8x32xf32, #tpu.memory_space<vmem>>, vector<8x32xf32>
      %c0_12 = arith.constant 0 : index
      %c0_13 = arith.constant 0 : index
      %13 = vector.load %arg5[%c0_12, %c0_13] : memref<1x32xf32, #tpu.memory_space<vmem>>, vector<1x32xf32>
      %14 = vector.broadcast %13 : vector<1x32xf32> to vector<8x32xf32>
      %15 = arith.addf %12, %14 : vector<8x32xf32>
      %cst_14 = arith.constant 0.000000e+00 : f32
      %16 = vector.broadcast %cst_14 : f32 to vector<8x32xf32>
      %17 = arith.maximumf %15, %16 : vector<8x32xf32>
      %c0_15 = arith.constant 0 : index
      %c0_16 = arith.constant 0 : index
      %18 = vector.load %arg6[%c0_15, %c0_16] : memref<8x32xf32, #tpu.memory_space<vmem>>, vector<8x32xf32>
      tpu.vector_store %arg6[%c0_15, %c0_16], %17 {strides = array<i32>} : memref<8x32xf32, #tpu.memory_space<vmem>>, vector<8x32xf32>,
    } else {
    }
    return
  }
  func.func @transform_0(%arg0: i32, %arg1: i32, %arg2: i32) -> (i32, i32) {
    %c0_i32 = arith.constant 0 : i32
    return %arg0, %arg2 : i32, i32
  }
  func.func @transform_1(%arg0: i32, %arg1: i32, %arg2: i32) -> (i32, i32) {
    %c0_i32 = arith.constant 0 : i32
    return %arg2, %arg1 : i32, i32
  }
  func.func @transform_2(%arg0: i32, %arg1: i32, %arg2: i32) -> (i32, i32) {
    %c0_i32 = arith.constant 0 : i32
    %c0_i32_0 = arith.constant 0 : i32
    return %c0_i32, %arg1 : i32, i32
  }
  func.func @transform_3(%arg0: i32, %arg1: i32, %arg2: i32) -> (i32, i32) {
    %c0_i32 = arith.constant 0 : i32
    return %arg0, %arg1 : i32, i32
  }
}

</mosaic_0001>

<llo_original>
// kernel: dense_relu.1
$region0: #{dense_relu.1}
  #allocation0 [shape = 'u32[]', space=smem, size = 0x4, offset = 0x4, fixed_abs, tag = 'smem constant byte address 0x4 - core index']
  #allocation1 [shape = 'u32[144,128]{1,0:T(1,128)}', space=vmem, size = 0x12000, scoped, tag = 'internal scratch']
  %s0 = inlined_call_operand.vmem [shape: bf16[8,32], index: 0, kind: input, shape index: {}]
  %s1 = inlined_call_operand.vmem [shape: bf16[32,32], index: 1, kind: input, shape index: {}]
  %s2 = inlined_call_operand.vmem [shape: f32[1,32], index: 2, kind: input, shape index: {}]
  %s3 = inlined_call_operand.hbm [shape: f32[8,32], index: 3, kind: output, shape index: {}]
  %s4 = sld [smem:[#allocation0]]
  $region30: #{dense_relu.1} parent=0
    _
  %s6 = ssub.s32 1, %s4
  %s7 = scalar_select 0, %s6, %s4
  $region1: #{dense_relu.1} parent=0
    #allocation2 [shape = 'u8[4096]{0}', space=vmem, size = 0x1000, scoped, tag = 'output window, operand 0, single buffered']
    #allocation3 [shape = 's32[1]{0}', space=sflag, size = 0x4, scoped, tag = 'scoped memory for dense_relu.1']
    %8 = vsyncpa [#allocation3], 0
    // Predicated region
    $region2: #{dense_relu.1} parent=1 // pred_check
      _
    $region3: #{dense_relu.1} parent=1 // pred_check_branch
      %10 = sbr.rel (0) target = $region5
    $region4: #{dense_relu.1} parent=1 // pred_region
      _
    $region5: #{dense_relu.1} parent=1 // pred_fallthru
      _
    // Predicated region
    $region6: #{dense_relu.1} parent=1 // pred_check
      _
    $region7: #{dense_relu.1} parent=1 // pred_check_branch
      %12 = sbr.rel (0) target = $region9
    $region8: #{dense_relu.1} parent=1 // pred_region
      _
    $region9: #{dense_relu.1} parent=1 // pred_fallthru
      _
    // Predicated region
    $region10: #{dense_relu.1} parent=1 // pred_check
      _
    $region11: #{dense_relu.1} parent=1 // pred_check_branch
      %14 = sbr.rel (0) target = $region13
    $region12: #{dense_relu.1} parent=1 // pred_region
      _
    $region13: #{dense_relu.1} parent=1 // pred_fallthru
      _
    %p16 = scmp.eq.s32.totalorder 0, 0
    // Predicated region
    $region14: #{dense_relu.1} parent=1 // pred_check
      %p17 = pneg %p16
    $region15: #{dense_relu.1} parent=1 // pred_check_branch
      %19 = sbr.rel (%p17) target = $region17
    $region16: #{dense_relu.1} parent=1 // pred_region
      %vm20 = vcmask 261120
      %21 = vst.msk [vmem:[#allocation2] sm:$0xff] %vm20, 0.0
    $region17: #{dense_relu.1} parent=1 // pred_fallthru
      _
    %v22 = vld [vmem:[#allocation2] sm:$0xff]
    %v23 = vld [vmem:[%s0] sm:$0xf]
    %v24 = vld [vmem:[%s1] sm:$0xf]
    %v25 = vld [vmem:[%s1 + $0x4] sm:$0xf]
    %v26 = vld [vmem:[%s1 + $0x8] sm:$0xf]
    %v27 = vld [vmem:[%s1 + $0xc] sm:$0xf]
    %v32 = vunpack.c.l.b16 %v24
    %v33 = vunpack.c.l.b16 %v25
    %v34 = vunpack.c.l.b16 %v26
    %v35 = vunpack.c.l.b16 %v27
    %v36 = vpack.c.b16 %v33, %v32
    %v37 = vpack.c.b16 %v35, %v34
    %vm40 = vcmask 261120
    %v42 = vsel %vm40, %v23, 0
    %44 = vmatprep.subr.bf16.mxu0 0
    %45 = vmatpush1.bf16.msra.mxu0 0
    %46 = vmatprep.subr.bf16.mxu0 0
    %47 = vmatpush1.bf16.msra.mxu0 0
    %48 = vmatprep.subr.bf16.mxu0 0
    %49 = vmatpush1.bf16.msra.mxu0 0
    %50 = vmatprep.subr.bf16.mxu0 0
    %51 = vmatpush1.bf16.msra.mxu0 0
    %52 = vmatprep.subr.bf16.mxu0 0
    %53 = vmatpush1.bf16.msra.mxu0 0
    %54 = vmatprep.subr.bf16.mxu0 0
    %55 = vmatpush1.bf16.msra.mxu0 0
    %56 = vmatprep.subr.bf16.mxu0 0
    %57 = vmatpush1.bf16.msra.mxu0 %v37
    %58 = vmatprep.subr.bf16.mxu0 0
    %59 = vmatpush1.bf16.msra.mxu0 %v36
    %60 = vmatprep.subr.bf16.mxu0 0
    %61 = vmatpush2.bf16.msra.mxu0 0
    %62 = vmatprep.subr.bf16.mxu0 0
    %63 = vmatpush2.bf16.msra.mxu0 0
    %64 = vmatprep.subr.bf16.mxu0 0
    %65 = vmatpush2.bf16.msra.mxu0 0
    %66 = vmatprep.subr.bf16.mxu0 0
    %67 = vmatpush2.bf16.msra.mxu0 0
    %68 = vmatprep.subr.bf16.mxu0 0
    %69 = vmatpush2.bf16.msra.mxu0 0
    %70 = vmatprep.subr.bf16.mxu0 0
    %71 = vmatpush2.bf16.msra.mxu0 0
    %72 = vmatprep.subr.bf16.mxu0 0
    %73 = vmatpush2.bf16.msra.mxu0 0
    %74 = vmatprep.subr.bf16.mxu0 0
    %75 = vmatpush2.bf16.msra.mxu0 0
    %76 = vmatprep.mubr.bf16.mxu0 0
    %77 = vmatmul.mubr.bf16.gmra.mxu0 %v42
    %v78 = vpop.f32.mrf.mxu0
    %v79 = vadd.f32 0.0, %v78
    %v80 = vpop.f32.mrf.mxu0
    %v81 = vpop.f32.mrf.mxu0
    %v82 = vpop.f32.mrf.mxu0
    %83 = vdwg.mxu0
    %v84 = vadd.f32 %v22, %v79
    %85 = vst.msk [vmem:[#allocation2] sm:$0xff] %vm40, %v84
    // Predicated region
    $region18: #{dense_relu.1} parent=1 // pred_check
      %p86 = pneg %p16
    $region19: #{dense_relu.1} parent=1 // pred_check_branch
      %88 = sbr.rel (%p86) target = $region21
    $region20: #{dense_relu.1} parent=1 // pred_region
      %v89 = vld [vmem:[#allocation2] sm:$0xff]
      %v90 = vld [vmem:[%s2] sm:$0x1]
      %v92 = vlaneseq
      %v93 = vshrl.u32 %v92, 7
      %v94 = vsub.s32 0, %v93
      %v95 = vrot.slane %v90, %v94
      %v97 = vadd.f32 %v89, %v95
      %v98 = vmax.f32 %v97, 0.0
      %99 = vst.msk [vmem:[#allocation2] sm:$0xff] %vm40, %v98
    $region21: #{dense_relu.1} parent=1 // pred_fallthru
      _
    // Predicated region
    $region22: #{dense_relu.1} parent=1 // pred_check
      _
    $region23: #{dense_relu.1} parent=1 // pred_check_branch
      %101 = sbr.rel (0) target = $region25
    $region24: #{dense_relu.1} parent=1 // pred_region
      %s103 = ssub.s32 128, 128
      %104 = vsyncadd [#allocation3], %s103
      %s106 = sshll.u32 [#allocation2], 4
      %s107 = int_to_ptr.vmem [resolvable:$true] %s106
      %109 = dma.vmem_to_hbm [thread:$0]  %s107, 128, %s3, [#allocation3]
    $region25: #{dense_relu.1} parent=1 // pred_fallthru
      _
    // Predicated region
    $region26: #{dense_relu.1} parent=1 // pred_check
      _
    $region27: #{dense_relu.1} parent=1 // pred_check_branch
      %111 = sbr.rel (0) target = $region29
    $region28: #{dense_relu.1} parent=1 // pred_region
      %112 = dma.done [#allocation3], 128
    $region29: #{dense_relu.1} parent=1 // pred_fallthru
      _
    %113 = vsyncpa [#allocation3], 1

</llo_original>
